<compile_context>
chip_gen: v6e
topology: v6e:2x2x1
jax: 0.10.0
libtpu: 0.0.40
codegen_flags: <defaults>
</compile_context>

<pallas_src>
import jax
import jax.numpy as jnp
from jax.experimental import pallas as pl
from jax.experimental.pallas import tpu as pltpu


def iwt_kernel(x_ref, o_ref):
    # x_ref block: (1, 4, TC, TH, W)   o_ref block: (1, TC, TH, 4*W)
    x1 = x_ref[0, 0].astype(jnp.float32)   # (TC, TH, W)
    x2 = x_ref[0, 1].astype(jnp.float32)
    x3 = x_ref[0, 2].astype(jnp.float32)
    x4 = x_ref[0, 3].astype(jnp.float32)

    # Butterfly with the /2 scale folded in: 8 adds + 4 muls per element.
    s_m = (x1 - x2) * 0.5
    s_p = (x1 + x2) * 0.5
    t_m = (x3 - x4) * 0.5
    t_p = (x3 + x4) * 0.5
    ee = s_m - t_m   # -> h[0::2, 0::2]
    oe = s_m + t_m   # -> h[1::2, 0::2]
    eo = s_p - t_p   # -> h[0::2, 1::2]
    oo = s_p + t_p   # -> h[1::2, 1::2]

    tc, th, w = ee.shape
    # Lane (column) interleave only; no sublane interleave needed with the folded
    # output layout.  even[i] = output row 2i, odd[i] = output row 2i+1.
    even = jnp.stack([ee, eo], axis=-1).reshape(tc, th, 2 * w)
    odd = jnp.stack([oe, oo], axis=-1).reshape(tc, th, 2 * w)

    o_ref[0, :, :, : 2 * w] = even.astype(o_ref.dtype)
    o_ref[0, :, :, 2 * w:] = odd.astype(o_ref.dtype)


def _vmem_budget():
    """Return (per-step working-set budget, vmem_limit_bytes), generation-aware."""
    cap = 64 * 1024 * 1024  # conservative default (v7x per-TC VMEM)
    try:
        cap = int(pltpu.get_tpu_info().vmem_capacity_bytes)
    except Exception:
        pass
    if cap >= 100 * 1024 * 1024:        # v5e / v6e: 128 MiB physical VMEM
        return 24 * 1024 * 1024, 96 * 1024 * 1024
    else:                               # v7x: 64 MiB per TensorCore
        return 10 * 1024 * 1024, 48 * 1024 * 1024


def _choose_tiles(B, Cout, H, W, in_itemsize, budget_bytes, min_steps=4):
    """Pick (channels-per-step, rows-per-step).

    Keeps the estimated per-step working set (double-buffered blocks plus
    in-kernel temporaries) within `budget_bytes`, while guaranteeing at least
    `min_steps` grid steps so the pipeline / megacore has work to overlap."""

    def working_set(tc, th):
        in_blk = 4 * tc * th * W * in_itemsize          # input block
        out_blk = tc * th * 4 * W * 4                   # f32 output block
        # ~3x out_blk of in-kernel temporaries (f32 band casts, ee..oo, interleaves)
        return 2 * (in_blk + out_blk) + 3 * out_blk

    # Row tiling candidates must satisfy the (8,128) rule: multiple of 8, or == H.
    if H % 8 == 0:
        th_cands = sorted([d for d in range(8, H + 1, 8) if H % d == 0], reverse=True)
    else:
        th_cands = [H]
    th = th_cands[-1]
    for cand in th_cands:                               # largest th that fits
        if working_set(1, cand) <= budget_bytes:
            th = cand
            break

    tc_cands = sorted([d for d in range(1, Cout + 1) if Cout % d == 0], reverse=True)
    tc = 1
    for cand in tc_cands:                               # largest tc that fits
        if working_set(cand, th) <= budget_bytes:
            tc = cand
            break

    # Guarantee enough grid steps for pipelining and v7x's 2 TensorCores.
    def steps(tc_, th_):
        return B * (Cout // tc_) * (H // th_)

    while steps(tc, th) < min_steps:
        smaller_th = [c for c in th_cands if c < th]
        if smaller_th:
            th = smaller_th[0]          # next smaller valid row tile
            continue
        smaller_tc = [c for c in tc_cands if c < tc]
        if smaller_tc:
            tc = smaller_tc[0]
            continue
        break                            # tensor is just too small to split further
    return tc, th


def iwt(x):
    """Pallas implementation of iwt_init; x is NCHW with C divisible by 4."""
    B, C, H, W = x.shape
    assert C % 4 == 0, "channel dim must be divisible by 4"
    Cout = C // 4

    # Free view: index [b, band, c] == x[b, band*Cout + c]. One input, one DMA/step.
    xv = x.reshape(B, 4, Cout, H, W)

    budget, vmem_limit = _vmem_budget()
    tc, th = _choose_tiles(B, Cout, H, W, x.dtype.itemsize, budget)
    grid = (B, Cout // tc, H // th)

    in_spec = pl.BlockSpec((1, 4, tc, th, W), lambda b, c, h: (b, 0, c, h, 0))
    # Folded output layout: (B, Cout, H, 4W); reshaped (contiguously, for free) to
    # (B, Cout, 2H, 2W) in the wrapper.  Lane dim is 4W instead of 2W.
    out_spec = pl.BlockSpec((1, tc, th, 4 * W), lambda b, c, h: (b, c, h, 0))

    out_flat = pl.pallas_call(
        iwt_kernel,
        out_shape=jax.ShapeDtypeStruct((B, Cout, H, 4 * W), jnp.float32),
        grid_spec=pltpu.PrefetchScalarGridSpec(
            num_scalar_prefetch=0,
            grid=grid,
            in_specs=[in_spec],
            out_specs=out_spec,
        ),
        compiler_params=pltpu.CompilerParams(
            dimension_semantics=("parallel", "parallel", "parallel"),
            vmem_limit_bytes=vmem_limit,
        ),
    )(xv)

    # Contiguous reshape: (B, Cout, H, [2, W, 2]) -> (B, Cout, 2H, 2W).
    return out_flat.reshape(B, Cout, 2 * H, 2 * W)


def iwt_ref(x):
    """Pure-JAX reference mirroring the PyTorch iwt_init."""
    B, C, H, W = x.shape
    Cout = C // 4
    x1 = x[:, 0 * Cout:1 * Cout].astype(jnp.float32) / 2
    x2 = x[:, 1 * Cout:2 * Cout].astype(jnp.float32) / 2
    x3 = x[:, 2 * Cout:3 * Cout].astype(jnp.float32) / 2
    x4 = x[:, 3 * Cout:4 * Cout].astype(jnp.float32) / 2
    h = jnp.zeros((B, Cout, 2 * H, 2 * W), jnp.float32)
    h = h.at[:, :, 0::2, 0::2].set(x1 - x2 - x3 + x4)
    h = h.at[:, :, 1::2, 0::2].set(x1 - x2 + x3 - x4)
    h = h.at[:, :, 0::2, 1::2].set(x1 + x2 - x3 - x4)
    h = h.at[:, :, 1::2, 1::2].set(x1 + x2 + x3 + x4)
    return h


if __name__ == "__main__":
    key = jax.random.PRNGKey(0)

    # Primary small shape from the module spec: B=2, C=4 (Cout=1), H=W=16.
    x = jax.random.normal(key, (2, 4, 16, 16), dtype=jnp.float32)
    out = iwt(x)
    jax.block_until_ready(out)
    assert out.shape == (2, 1, 32, 32), out.shape
    assert jnp.allclose(out, iwt_ref(x), atol=1e-5, rtol=1e-5), "mismatch (C=4)"

    # Multi-channel case to exercise the channel-tiled path (Cout=2).
    x2 = jax.random.normal(jax.random.PRNGKey(1), (2, 8, 16, 16), dtype=jnp.float32)
    out2 = iwt(x2)
    jax.block_until_ready(out2)
    assert out2.shape == (2, 2, 32, 32), out2.shape
    assert jnp.allclose(out2, iwt_ref(x2), atol=1e-5, rtol=1e-5), "mismatch (C=8)"

    # Small-H case (H == th) exercising the min-step splitting on channels (Cout=4).
    x3 = jax.random.normal(jax.random.PRNGKey(2), (1, 16, 8, 8), dtype=jnp.float32)
    out3 = iwt(x3)
    jax.block_until_ready(out3)
    assert out3.shape == (1, 4, 16, 16), out3.shape
    assert jnp.allclose(out3, iwt_ref(x3), atol=1e-5, rtol=1e-5), "mismatch (C=16)"

    print("KERNEL_OK")
</pallas_src>

<mosaic_0001>
module attributes {stable_mosaic.version = 11 : i64} {
  func.func @iwt_kernel(%arg0: i32, %arg1: i32, %arg2: i32, %arg3: memref<1x4x1x8x16xf32, #tpu.memory_space<vmem>>, %arg4: memref<1x1x8x64xf32, #tpu.memory_space<vmem>>) attributes {dimension_semantics = [#tpu.dimension_semantics<parallel>, #tpu.dimension_semantics<parallel>, #tpu.dimension_semantics<parallel>], iteration_bounds = array<i64: 2, 1, 2>, scalar_prefetch = 0 : i64, scratch_operands = 0 : i64, tpu.core_type = #tpu.core_type<tc>, window_params = [{transform_indices = @transform_0, window_bounds = array<i64: 1, 4, 1, 8, 16>}, {transform_indices = @transform_1, window_bounds = array<i64: 1, 1, 8, 64>}]} {
    %c0 = arith.constant 0 : index
    %c0_0 = arith.constant 0 : index
    %c0_1 = arith.constant 0 : index
    %c0_2 = arith.constant 0 : index
    %c0_3 = arith.constant 0 : index
    %0 = vector.load %arg3[%c0, %c0_0, %c0_1, %c0_2, %c0_3] : memref<1x4x1x8x16xf32, #tpu.memory_space<vmem>>, vector<1x1x1x8x16xf32>
    %1 = vector.shape_cast %0 : vector<1x1x1x8x16xf32> to vector<1x8x16xf32>
    %c0_4 = arith.constant 0 : index
    %c1 = arith.constant 1 : index
    %c0_5 = arith.constant 0 : index
    %c0_6 = arith.constant 0 : index
    %c0_7 = arith.constant 0 : index
    %2 = vector.load %arg3[%c0_4, %c1, %c0_5, %c0_6, %c0_7] : memref<1x4x1x8x16xf32, #tpu.memory_space<vmem>>, vector<1x1x1x8x16xf32>
    %3 = vector.shape_cast %2 : vector<1x1x1x8x16xf32> to vector<1x8x16xf32>
    %c0_8 = arith.constant 0 : index
    %c2 = arith.constant 2 : index
    %c0_9 = arith.constant 0 : index
    %c0_10 = arith.constant 0 : index
    %c0_11 = arith.constant 0 : index
    %4 = vector.load %arg3[%c0_8, %c2, %c0_9, %c0_10, %c0_11] : memref<1x4x1x8x16xf32, #tpu.memory_space<vmem>>, vector<1x1x1x8x16xf32>
    %5 = vector.shape_cast %4 : vector<1x1x1x8x16xf32> to vector<1x8x16xf32>
    %c0_12 = arith.constant 0 : index
    %c3 = arith.constant 3 : index
    %c0_13 = arith.constant 0 : index
    %c0_14 = arith.constant 0 : index
    %c0_15 = arith.constant 0 : index
    %6 = vector.load %arg3[%c0_12, %c3, %c0_13, %c0_14, %c0_15] : memref<1x4x1x8x16xf32, #tpu.memory_space<vmem>>, vector<1x1x1x8x16xf32>
    %7 = vector.shape_cast %6 : vector<1x1x1x8x16xf32> to vector<1x8x16xf32>
    %8 = arith.subf %1, %3 : vector<1x8x16xf32>
    %cst = arith.constant 5.000000e-01 : f32
    %9 = vector.broadcast %cst : f32 to vector<1x8x16xf32>
    %10 = arith.mulf %8, %9 : vector<1x8x16xf32>
    %11 = arith.addf %1, %3 : vector<1x8x16xf32>
    %cst_16 = arith.constant 5.000000e-01 : f32
    %12 = vector.broadcast %cst_16 : f32 to vector<1x8x16xf32>
    %13 = arith.mulf %11, %12 : vector<1x8x16xf32>
    %14 = arith.subf %5, %7 : vector<1x8x16xf32>
    %cst_17 = arith.constant 5.000000e-01 : f32
    %15 = vector.broadcast %cst_17 : f32 to vector<1x8x16xf32>
    %16 = arith.mulf %14, %15 : vector<1x8x16xf32>
    %17 = arith.addf %5, %7 : vector<1x8x16xf32>
    %cst_18 = arith.constant 5.000000e-01 : f32
    %18 = vector.broadcast %cst_18 : f32 to vector<1x8x16xf32>
    %19 = arith.mulf %17, %18 : vector<1x8x16xf32>
    %20 = arith.subf %10, %16 : vector<1x8x16xf32>
    %21 = arith.addf %10, %16 : vector<1x8x16xf32>
    %22 = arith.subf %13, %19 : vector<1x8x16xf32>
    %23 = arith.addf %13, %19 : vector<1x8x16xf32>
    %24 = vector.shape_cast %20 : vector<1x8x16xf32> to vector<1x8x16x1xf32>
    %25 = vector.shape_cast %22 : vector<1x8x16xf32> to vector<1x8x16x1xf32>
    %26 = tpu.concatenate %24, %25 in 3 : vector<1x8x16x1xf32>, vector<1x8x16x1xf32> -> vector<1x8x16x2xf32>
    %27 = vector.shape_cast %26 : vector<1x8x16x2xf32> to vector<1x8x32xf32>
    %28 = vector.shape_cast %21 : vector<1x8x16xf32> to vector<1x8x16x1xf32>
    %29 = vector.shape_cast %23 : vector<1x8x16xf32> to vector<1x8x16x1xf32>
    %30 = tpu.concatenate %28, %29 in 3 : vector<1x8x16x1xf32>, vector<1x8x16x1xf32> -> vector<1x8x16x2xf32>
    %31 = vector.shape_cast %30 : vector<1x8x16x2xf32> to vector<1x8x32xf32>
    %c0_19 = arith.constant 0 : index
    %c0_20 = arith.constant 0 : index
    %c0_21 = arith.constant 0 : index
    %c0_22 = arith.constant 0 : index
    %32 = vector.load %arg4[%c0_19, %c0_20, %c0_21, %c0_22] : memref<1x1x8x64xf32, #tpu.memory_space<vmem>>, vector<1x1x8x32xf32>
    %33 = vector.shape_cast %32 : vector<1x1x8x32xf32> to vector<1x8x32xf32>
    %34 = vector.shape_cast %27 : vector<1x8x32xf32> to vector<1x1x8x32xf32>
    tpu.vector_store %arg4[%c0_19, %c0_20, %c0_21, %c0_22], %34 {strides = array<i32>} : memref<1x1x8x64xf32, #tpu.memory_space<vmem>>, vector<1x1x8x32xf32>,
    %c0_23 = arith.constant 0 : index
    %c0_24 = arith.constant 0 : index
    %c0_25 = arith.constant 0 : index
    %c32 = arith.constant 32 : index
    %35 = vector.load %arg4[%c0_23, %c0_24, %c0_25, %c32] : memref<1x1x8x64xf32, #tpu.memory_space<vmem>>, vector<1x1x8x32xf32>
    %36 = vector.shape_cast %35 : vector<1x1x8x32xf32> to vector<1x8x32xf32>
    %37 = vector.shape_cast %31 : vector<1x8x32xf32> to vector<1x1x8x32xf32>
    tpu.vector_store %arg4[%c0_23, %c0_24, %c0_25, %c32], %37 {strides = array<i32>} : memref<1x1x8x64xf32, #tpu.memory_space<vmem>>, vector<1x1x8x32xf32>,
    return
  }
  func.func @transform_0(%arg0: i32, %arg1: i32, %arg2: i32) -> (i32, i32, i32, i32, i32) {
    %c0_i32 = arith.constant 0 : i32
    %c0_i32_0 = arith.constant 0 : i32
    %c0_i32_1 = arith.constant 0 : i32
    return %arg0, %c0_i32, %arg1, %arg2, %c0_i32_0 : i32, i32, i32, i32, i32
  }
  func.func @transform_1(%arg0: i32, %arg1: i32, %arg2: i32) -> (i32, i32, i32, i32) {
    %c0_i32 = arith.constant 0 : i32
    %c0_i32_0 = arith.constant 0 : i32
    return %arg0, %arg1, %arg2, %c0_i32 : i32, i32, i32, i32
  }
}

</mosaic_0001>

<llo_original>
// kernel: tpu_custom_call.1
$region0: #{tpu_custom_call.1}
  #allocation0 [shape = 'u32[]', space=smem, size = 0x4, offset = 0x4, fixed_abs, tag = 'smem constant byte address 0x4 - core index']
  #allocation1 [shape = 'u32[144,128]{1,0:T(1,128)}', space=vmem, size = 0x12000, scoped, tag = 'internal scratch']
  %s0 = inlined_call_operand.hbm [shape: f32[2,4,1,16,16], index: 0, kind: input, shape index: {}]
  %s1 = inlined_call_operand.hbm [shape: f32[2,1,16,64], index: 1, kind: output, shape index: {}]
  %s2 = sld [smem:[#allocation0]]
  $region41: #{tpu_custom_call.1} parent=0
    _
  %s4 = ssub.s32 1, %s2
  %s5 = scalar_select 0, %s4, %s2
  $region1: #{tpu_custom_call.1} parent=0
    #allocation2 [shape = 'u8[32768]{0}', space=vmem, size = 0x8000, scoped, tag = 'input window, operand 0']
    #allocation3 [shape = 's32[2]{0}', space=sflag, size = 0x8, scoped, tag = 'scoped memory for tpu_custom_call.1']
    #allocation4 [shape = 's32[2]{0}', space=sflag, size = 0x8, scoped, tag = 'scoped memory for tpu_custom_call.1']
    #allocation5 [shape = 'u8[8192]{0}', space=vmem, size = 0x2000, scoped, tag = 'output window, operand 0']
    %6 = vsyncpa [#allocation3], 0
    %s7 = scalar_lea.sflag [#allocation3], 1
    %8 = vsyncpa %s7, 0
    %9 = vsyncpa [#allocation4], 0
    %s10 = scalar_lea.sflag [#allocation4], 1
    %11 = vsyncpa %s10, 0
    loop: start=0, step=1, limit=6
    $region2: #{tpu_custom_call.1} parent=1 // loop_pre_header
      _
    $region3: #{tpu_custom_call.1} parent=1 // loop_header
      %s13 = sphi 0, %s17
      %p14 = scmp.ge.s32.totalorder %s13, 6
      %s20 = sphi 0, %s39
      %s21 = sphi 0, %s35
      %s22 = sphi 0, %s31
      %s23 = sphi 0, %s20
      %s24 = sphi 0, %s21
      %s25 = sphi 0, %s22
      %s26 = sphi 0, %s23
      %s27 = sphi 0, %s24
      %s28 = sphi 0, %s25
      %s46 = sphi 0, %s48
      %s49 = sphi 0, %s46
      %s50 = sphi 0, %s49
      %s66 = sphi 0, %s50
      %s76 = sphi 0, %s78
      %s79 = sphi 0, %s76
      %s80 = sphi 0, %s79
      %s96 = sphi 0, %s80
    $region4: #{tpu_custom_call.1} parent=1 // loop_header_branch
      %16 = sbr.rel (%p14) target = $region8
    $region5: #{tpu_custom_call.1} parent=1 // loop_body
      %s18 = ssub.s32 %s13, 1
      %s19 = ssub.s32 %s13, 2
      %s29 = sadd.s32 1, %s22
      %p30 = scmp.ge.s32.totalorder %s29, 2
      %s31 = scalar_select %p30, 0, %s29
      %s32 = sadd.s32 1, %s21
      %s33 = scalar_select %p30, %s32, %s21
      %p34 = scmp.ge.s32.totalorder %s33, 1
      %s35 = scalar_select %p34, 0, %s33
      %s36 = sadd.s32 1, %s20
      %s37 = scalar_select %p34, %s36, %s20
      %p38 = scmp.ge.s32.totalorder %s37, 2
      %s39 = scalar_select %p38, 0, %s37
      %s40 = ssub.s32 %s20, %s39
      %s41 = ssub.s32 %s21, %s35
      %s42 = sor.u32 %s40, %s41
      %s43 = ssub.s32 %s22, %s31
      %s44 = sor.u32 %s42, %s43
      %p45 = scmp.eq.s32.totalorder %s44, 0
      %s47 = sadd.s32 %s46, 1
      %s48 = scalar_select %p45, %s46, %s47
      %p51 = pneg %p45
      %p52 = scmp.eq.s32.totalorder %s13, 3
      %p53 = por %p51, %p52
      %p54 = scmp.ne.s32.totalorder %s46, %s49
      %p55 = scmp.eq.s32.totalorder %s13, 0
      %p56 = por %p54, %p55
      %p57 = scmp.ne.s32.totalorder %s46, %s49
      %p58 = scmp.eq.s32.totalorder %s18, 3
      %p59 = por %p57, %p58
      %p60 = scmp.ne.s32.totalorder %s49, %s50
      %p61 = scmp.eq.s32.totalorder %s18, 0
      %p62 = por %p60, %p61
      %p63 = scmp.ne.s32.totalorder %s49, %s50
      %p64 = scmp.eq.s32.totalorder %s19, 3
      %p65 = por %p63, %p64
      %p67 = scmp.ne.s32.totalorder %s50, %s66
      %p68 = scmp.eq.s32.totalorder %s19, 0
      %p69 = por %p67, %p68
      %s70 = ssub.s32 %s20, %s39
      %s71 = ssub.s32 %s21, %s35
      %s72 = sor.u32 %s70, %s71
      %s73 = ssub.s32 %s22, %s31
      %s74 = sor.u32 %s72, %s73
      %p75 = scmp.eq.s32.totalorder %s74, 0
      %s77 = sadd.s32 %s76, 1
      %s78 = scalar_select %p75, %s76, %s77
      %p81 = pneg %p75
      %p82 = scmp.eq.s32.totalorder %s13, 3
      %p83 = por %p81, %p82
      %p84 = scmp.ne.s32.totalorder %s76, %s79
      %p85 = scmp.eq.s32.totalorder %s13, 0
      %p86 = por %p84, %p85
      %p87 = scmp.ne.s32.totalorder %s76, %s79
      %p88 = scmp.eq.s32.totalorder %s18, 3
      %p89 = por %p87, %p88
      %p90 = scmp.ne.s32.totalorder %s79, %s80
      %p91 = scmp.eq.s32.totalorder %s18, 0
      %p92 = por %p90, %p91
      %p93 = scmp.ne.s32.totalorder %s79, %s80
      %p94 = scmp.eq.s32.totalorder %s19, 3
      %p95 = por %p93, %p94
      %p97 = scmp.ne.s32.totalorder %s80, %s96
      %p98 = scmp.eq.s32.totalorder %s19, 0
      %p99 = por %p97, %p98
      %p100 = scmp.le.s32.totalorder 1, %s13
      %p101 = scmp.lt.s32.totalorder %s13, 5
      %p102 = pnand %p100, %p101
      %p103 = pneg %p102
      // Predicated region
      $region9: #{tpu_custom_call.1} parent=5 // pred_check
        _
      $region10: #{tpu_custom_call.1} parent=5 // pred_check_branch
        %105 = sbr.rel (%p102) target = $region12
      $region11: #{tpu_custom_call.1} parent=5 // pred_region
        %s106 = ssub.s32 %s13, 1
      $region12: #{tpu_custom_call.1} parent=5 // pred_fallthru
        _
      %p107 = scmp.lt.s32.totalorder %s13, 4
      // Predicated region
      $region13: #{tpu_custom_call.1} parent=5 // pred_check
        %p108 = pneg %p107
      $region14: #{tpu_custom_call.1} parent=5 // pred_check_branch
        %110 = sbr.rel (%p108) target = $region16
      $region15: #{tpu_custom_call.1} parent=5 // pred_region
        // Predicated region
        $region17: #{tpu_custom_call.1} parent=15 // pred_check
          %p111 = pneg %p56
        $region18: #{tpu_custom_call.1} parent=15 // pred_check_branch
          %113 = sbr.rel (%p111) target = $region20
        $region19: #{tpu_custom_call.1} parent=15 // pred_region
          %s114 = sand.u32 %s46, 1
          %s115 = scalar_lea.sflag [#allocation3], %s114
          %s116 = sand.u32 %s46, 1
          %s117 = smul.addr %s116, 32
          %s118 = scalar_lea.vmem [#allocation2], %s117
          %s120 = ssub.s32 512, 512
          %121 = vsyncadd %s115, %s120
          %s122 = smul.addr %s21, 2
          %s123 = sadd.s32 %s22, %s122
          %s124 = smul.addr %s20, 8
          %s125 = sadd.s32 %s123, %s124
          %s126 = smul.addr %s125, 128
          %s127 = scalar_lea.hbm %s0, %s126
          %s128 = sshll.u32 %s118, 4
          %s129 = int_to_ptr.vmem [resolvable:$true] %s128
          %134 = dma.hbm_to_vmem [thread:$0]  %s127, 512, %s129, %s115, 256, 128, 8
        $region20: #{tpu_custom_call.1} parent=15 // pred_fallthru
          _
      $region16: #{tpu_custom_call.1} parent=5 // pred_fallthru
        _
      %p135 = scmp.le.s32.totalorder 1, %s13
      %p136 = scmp.lt.s32.totalorder %s13, 5
      %p137 = pnand %p135, %p136
      %p138 = pneg %p137
      // Predicated region
      $region21: #{tpu_custom_call.1} parent=5 // pred_check
        _
      $region22: #{tpu_custom_call.1} parent=5 // pred_check_branch
        %140 = sbr.rel (%p137) target = $region24
      $region23: #{tpu_custom_call.1} parent=5 // pred_region
        %s141 = ssub.s32 %s13, 1
        %s142 = sand.u32 %s49, 1
        %s143 = scalar_lea.sflag [#allocation3], %s142
        %s144 = sand.u32 %s49, 1
        %s145 = smul.addr %s144, 32
        %s146 = scalar_lea.vmem [#allocation2], %s145
        // Predicated region
        $region25: #{tpu_custom_call.1} parent=23 // pred_check
          %p147 = pneg %p62
        $region26: #{tpu_custom_call.1} parent=23 // pred_check_branch
          %149 = sbr.rel (%p147) target = $region28
        $region27: #{tpu_custom_call.1} parent=23 // pred_region
          %150 = dma.done %s143, 512
        $region28: #{tpu_custom_call.1} parent=23 // pred_fallthru
          _
        %s151 = sand.u32 %s49, 1
        %s152 = scalar_lea.sflag [#allocation3], %s151
        %s153 = sand.u32 %s49, 1
        %s154 = smul.addr %s153, 32
        %s155 = scalar_lea.vmem [#allocation2], %s154
        %p156 = pneg %p62
        %p157 = pneg %p59
        %p158 = pneg %p92
        %p159 = pneg %p89
        %s160 = sand.u32 %s79, 1
        %s161 = scalar_lea.sflag [#allocation4], %s160
        %s162 = sand.u32 %s79, 1
        %s163 = smul.addr %s162, 8
        %s164 = scalar_lea.vmem [#allocation5], %s163
        %v165 = vld [vmem:[%s146] sm:$0xff]
        %s166 = scalar_lea.vmem %s146, 8 [#allocation2]
        %v167 = vld [vmem:[%s166] sm:$0xff]
        %s168 = scalar_lea.vmem %s146, 16 [#allocation2]
        %v169 = vld [vmem:[%s168] sm:$0xff]
        %s170 = scalar_lea.vmem %s146, 24 [#allocation2]
        %v171 = vld [vmem:[%s170] sm:$0xff]
        %v172 = vsub.f32 %v165, %v167
        %v173 = vmul.f32 %v172, 0.5
        %v174 = vadd.f32 %v165, %v167
        %v175 = vmul.f32 %v174, 0.5
        %v176 = vsub.f32 %v169, %v171
        %v177 = vmul.f32 %v176, 0.5
        %v178 = vadd.f32 %v169, %v171
        %v179 = vmul.f32 %v178, 0.5
        %v180 = vsub.f32 %v173, %v177
        %v181 = vadd.f32 %v173, %v177
        %v182 = vsub.f32 %v175, %v179
        %v183 = vadd.f32 %v175, %v179
        %v184 = vlaneseq
        %v185 = vshrl.u32 %v184, 7
        %v186 = vsub.s32 0, %v185
        %v187 = vrot.slane %v180, %v186
        %189 = vbcast.lane.b32.xlu0 %v187, 256
        %v190 = vpop.permute.xlu0 %189
        %s192 = sor.u32 256, 8
        %193 = vbcast.lane.b32.xlu0 %v187, %s192
        %v194 = vpop.permute.xlu0 %193
        %v195 = vlaneseq
        %v196 = vshrl.u32 %v195, 7
        %v197 = vsub.s32 1, %v196
        %v198 = vrot.slane %v180, %v197
        %200 = vbcast.lane.b32.xlu0 %v198, 256
        %v201 = vpop.permute.xlu0 %200
        %s203 = sor.u32 256, 8
        %204 = vbcast.lane.b32.xlu0 %v198, %s203
        %v205 = vpop.permute.xlu0 %204
        %v206 = vlaneseq
        %v207 = vshrl.u32 %v206, 7
        %v208 = vsub.s32 2, %v207
        %v209 = vrot.slane %v180, %v208
        %211 = vbcast.lane.b32.xlu0 %v209, 256
        %v212 = vpop.permute.xlu0 %211
        %s214 = sor.u32 256, 8
        %215 = vbcast.lane.b32.xlu0 %v209, %s214
        %v216 = vpop.permute.xlu0 %215
        %v217 = vlaneseq
        %v218 = vshrl.u32 %v217, 7
        %v219 = vsub.s32 3, %v218
        %v220 = vrot.slane %v180, %v219
        %222 = vbcast.lane.b32.xlu0 %v220, 256
        %v223 = vpop.permute.xlu0 %222
        %s225 = sor.u32 256, 8
        %226 = vbcast.lane.b32.xlu0 %v220, %s225
        %v227 = vpop.permute.xlu0 %226
        %v228 = vlaneseq
        %v229 = vshrl.u32 %v228, 7
        %v230 = vsub.s32 4, %v229
        %v231 = vrot.slane %v180, %v230
        %233 = vbcast.lane.b32.xlu0 %v231, 256
        %v234 = vpop.permute.xlu0 %233
        %s236 = sor.u32 256, 8
        %237 = vbcast.lane.b32.xlu0 %v231, %s236
        %v238 = vpop.permute.xlu0 %237
        %v239 = vlaneseq
        %v240 = vshrl.u32 %v239, 7
        %v241 = vsub.s32 5, %v240
        %v242 = vrot.slane %v180, %v241
        %244 = vbcast.lane.b32.xlu0 %v242, 256
        %v245 = vpop.permute.xlu0 %244
        %s247 = sor.u32 256, 8
        %248 = vbcast.lane.b32.xlu0 %v242, %s247
        %v249 = vpop.permute.xlu0 %248
        %v250 = vlaneseq
        %v251 = vshrl.u32 %v250, 7
        %v252 = vsub.s32 6, %v251
        %v253 = vrot.slane %v180, %v252
        %255 = vbcast.lane.b32.xlu0 %v253, 256
        %v256 = vpop.permute.xlu0 %255
        %s258 = sor.u32 256, 8
        %259 = vbcast.lane.b32.xlu0 %v253, %s258
        %v260 = vpop.permute.xlu0 %259
        %v261 = vlaneseq
        %v262 = vshrl.u32 %v261, 7
        %v263 = vsub.s32 7, %v262
        %v264 = vrot.slane %v180, %v263
        %266 = vbcast.lane.b32.xlu0 %v264, 256
        %v267 = vpop.permute.xlu0 %266
        %s269 = sor.u32 256, 8
        %270 = vbcast.lane.b32.xlu0 %v264, %s269
        %v271 = vpop.permute.xlu0 %270
        %v272 = vlaneseq
        %v273 = vshrl.u32 %v272, 7
        %v274 = vsub.s32 0, %v273
        %v275 = vrot.slane %v182, %v274
        %277 = vbcast.lane.b32.xlu0 %v275, 256
        %v278 = vpop.permute.xlu0 %277
        %s280 = sor.u32 256, 8
        %281 = vbcast.lane.b32.xlu0 %v275, %s280
        %v282 = vpop.permute.xlu0 %281
        %v283 = vlaneseq
        %v284 = vshrl.u32 %v283, 7
        %v285 = vsub.s32 1, %v284
        %v286 = vrot.slane %v182, %v285
        %288 = vbcast.lane.b32.xlu0 %v286, 256
        %v289 = vpop.permute.xlu0 %288
        %s291 = sor.u32 256, 8
        %292 = vbcast.lane.b32.xlu0 %v286, %s291
        %v293 = vpop.permute.xlu0 %292
        %v294 = vlaneseq
        %v295 = vshrl.u32 %v294, 7
        %v296 = vsub.s32 2, %v295
        %v297 = vrot.slane %v182, %v296
        %299 = vbcast.lane.b32.xlu0 %v297, 256
        %v300 = vpop.permute.xlu0 %299
        %s302 = sor.u32 256, 8
        %303 = vbcast.lane.b32.xlu0 %v297, %s302
        %v304 = vpop.permute.xlu0 %303
        %v305 = vlaneseq
        %v306 = vshrl.u32 %v305, 7
        %v307 = vsub.s32 3, %v306
        %v308 = vrot.slane %v182, %v307
        %310 = vbcast.lane.b32.xlu0 %v308, 256
        %v311 = vpop.permute.xlu0 %310
        %s313 = sor.u32 256, 8
        %314 = vbcast.lane.b32.xlu0 %v308, %s313
        %v315 = vpop.permute.xlu0 %314
        %v316 = vlaneseq
        %v317 = vshrl.u32 %v316, 7
        %v318 = vsub.s32 4, %v317
        %v319 = vrot.slane %v182, %v318
        %321 = vbcast.lane.b32.xlu0 %v319, 256
        %v322 = vpop.permute.xlu0 %321
        %s324 = sor.u32 256, 8
        %325 = vbcast.lane.b32.xlu0 %v319, %s324
        %v326 = vpop.permute.xlu0 %325
        %v327 = vlaneseq
        %v328 = vshrl.u32 %v327, 7
        %v329 = vsub.s32 5, %v328
        %v330 = vrot.slane %v182, %v329
        %332 = vbcast.lane.b32.xlu0 %v330, 256
        %v333 = vpop.permute.xlu0 %332
        %s335 = sor.u32 256, 8
        %336 = vbcast.lane.b32.xlu0 %v330, %s335
        %v337 = vpop.permute.xlu0 %336
        %v338 = vlaneseq
        %v339 = vshrl.u32 %v338, 7
        %v340 = vsub.s32 6, %v339
        %v341 = vrot.slane %v182, %v340
        %343 = vbcast.lane.b32.xlu0 %v341, 256
        %v344 = vpop.permute.xlu0 %343
        %s346 = sor.u32 256, 8
        %347 = vbcast.lane.b32.xlu0 %v341, %s346
        %v348 = vpop.permute.xlu0 %347
        %v349 = vlaneseq
        %v350 = vshrl.u32 %v349, 7
        %v351 = vsub.s32 7, %v350
        %v352 = vrot.slane %v182, %v351
        %354 = vbcast.lane.b32.xlu0 %v352, 256
        %v355 = vpop.permute.xlu0 %354
        %s357 = sor.u32 256, 8
        %358 = vbcast.lane.b32.xlu0 %v352, %s357
        %v359 = vpop.permute.xlu0 %358
        %vm360 = vcmask 7168
        %v361 = vsel %vm360, %v190, %v278
        %v362 = vsel %vm360, %v194, %v282
        %v363 = vsel %vm360, %v201, %v289
        %v364 = vsel %vm360, %v205, %v293
        %v365 = vsel %vm360, %v212, %v300
        %v366 = vsel %vm360, %v216, %v304
        %v367 = vsel %vm360, %v223, %v311
        %v368 = vsel %vm360, %v227, %v315
        %v369 = vsel %vm360, %v234, %v322
        %v370 = vsel %vm360, %v238, %v326
        %v371 = vsel %vm360, %v245, %v333
        %v372 = vsel %vm360, %v249, %v337
        %v373 = vsel %vm360, %v256, %v344
        %v374 = vsel %vm360, %v260, %v348
        %v375 = vsel %vm360, %v267, %v355
        %v376 = vsel %vm360, %v271, %v359
        %v377 = vlaneseq
        %v378 = vshrl.u32 %v377, 7
        %v379 = vsub.s32 0, %v378
        %v380 = vrot.slane %v181, %v379
        %382 = vbcast.lane.b32.xlu0 %v380, 256
        %v383 = vpop.permute.xlu0 %382
        %s385 = sor.u32 256, 8
        %386 = vbcast.lane.b32.xlu0 %v380, %s385
        %v387 = vpop.permute.xlu0 %386
        %v388 = vlaneseq
        %v389 = vshrl.u32 %v388, 7
        %v390 = vsub.s32 1, %v389
        %v391 = vrot.slane %v181, %v390
        %393 = vbcast.lane.b32.xlu0 %v391, 256
        %v394 = vpop.permute.xlu0 %393
        %s396 = sor.u32 256, 8
        %397 = vbcast.lane.b32.xlu0 %v391, %s396
        %v398 = vpop.permute.xlu0 %397
        %v399 = vlaneseq
        %v400 = vshrl.u32 %v399, 7
        %v401 = vsub.s32 2, %v400
        %v402 = vrot.slane %v181, %v401
        %404 = vbcast.lane.b32.xlu0 %v402, 256
        %v405 = vpop.permute.xlu0 %404
        %s407 = sor.u32 256, 8
        %408 = vbcast.lane.b32.xlu0 %v402, %s407
        %v409 = vpop.permute.xlu0 %408
        %v410 = vlaneseq
        %v411 = vshrl.u32 %v410, 7
        %v412 = vsub.s32 3, %v411
        %v413 = vrot.slane %v181, %v412
        %415 = vbcast.lane.b32.xlu0 %v413, 256
        %v416 = vpop.permute.xlu0 %415
        %s418 = sor.u32 256, 8
        %419 = vbcast.lane.b32.xlu0 %v413, %s418
        %v420 = vpop.permute.xlu0 %419
        %v421 = vlaneseq
        %v422 = vshrl.u32 %v421, 7
        %v423 = vsub.s32 4, %v422
        %v424 = vrot.slane %v181, %v423
        %426 = vbcast.lane.b32.xlu0 %v424, 256
        %v427 = vpop.permute.xlu0 %426
        %s429 = sor.u32 256, 8
        %430 = vbcast.lane.b32.xlu0 %v424, %s429
        %v431 = vpop.permute.xlu0 %430
        %v432 = vlaneseq
        %v433 = vshrl.u32 %v432, 7
        %v434 = vsub.s32 5, %v433
        %v435 = vrot.slane %v181, %v434
        %437 = vbcast.lane.b32.xlu0 %v435, 256
        %v438 = vpop.permute.xlu0 %437
        %s440 = sor.u32 256, 8
        %441 = vbcast.lane.b32.xlu0 %v435, %s440
        %v442 = vpop.permute.xlu0 %441
        %v443 = vlaneseq
        %v444 = vshrl.u32 %v443, 7
        %v445 = vsub.s32 6, %v444
        %v446 = vrot.slane %v181, %v445
        %448 = vbcast.lane.b32.xlu0 %v446, 256
        %v449 = vpop.permute.xlu0 %448
        %s451 = sor.u32 256, 8
        %452 = vbcast.lane.b32.xlu0 %v446, %s451
        %v453 = vpop.permute.xlu0 %452
        %v454 = vlaneseq
        %v455 = vshrl.u32 %v454, 7
        %v456 = vsub.s32 7, %v455
        %v457 = vrot.slane %v181, %v456
        %459 = vbcast.lane.b32.xlu0 %v457, 256
        %v460 = vpop.permute.xlu0 %459
        %s462 = sor.u32 256, 8
        %463 = vbcast.lane.b32.xlu0 %v457, %s462
        %v464 = vpop.permute.xlu0 %463
        %v465 = vlaneseq
        %v466 = vshrl.u32 %v465, 7
        %v467 = vsub.s32 0, %v466
        %v468 = vrot.slane %v183, %v467
        %470 = vbcast.lane.b32.xlu0 %v468, 256
        %v471 = vpop.permute.xlu0 %470
        %s473 = sor.u32 256, 8
        %474 = vbcast.lane.b32.xlu0 %v468, %s473
        %v475 = vpop.permute.xlu0 %474
        %v476 = vlaneseq
        %v477 = vshrl.u32 %v476, 7
        %v478 = vsub.s32 1, %v477
        %v479 = vrot.slane %v183, %v478
        %481 = vbcast.lane.b32.xlu0 %v479, 256
        %v482 = vpop.permute.xlu0 %481
        %s484 = sor.u32 256, 8
        %485 = vbcast.lane.b32.xlu0 %v479, %s484
        %v486 = vpop.permute.xlu0 %485
        %v487 = vlaneseq
        %v488 = vshrl.u32 %v487, 7
        %v489 = vsub.s32 2, %v488
        %v490 = vrot.slane %v183, %v489
        %492 = vbcast.lane.b32.xlu0 %v490, 256
        %v493 = vpop.permute.xlu0 %492
        %s495 = sor.u32 256, 8
        %496 = vbcast.lane.b32.xlu0 %v490, %s495
        %v497 = vpop.permute.xlu0 %496
        %v498 = vlaneseq
        %v499 = vshrl.u32 %v498, 7
        %v500 = vsub.s32 3, %v499
        %v501 = vrot.slane %v183, %v500
        %503 = vbcast.lane.b32.xlu0 %v501, 256
        %v504 = vpop.permute.xlu0 %503
        %s506 = sor.u32 256, 8
        %507 = vbcast.lane.b32.xlu0 %v501, %s506
        %v508 = vpop.permute.xlu0 %507
        %v509 = vlaneseq
        %v510 = vshrl.u32 %v509, 7
        %v511 = vsub.s32 4, %v510
        %v512 = vrot.slane %v183, %v511
        %514 = vbcast.lane.b32.xlu0 %v512, 256
        %v515 = vpop.permute.xlu0 %514
        %s517 = sor.u32 256, 8
        %518 = vbcast.lane.b32.xlu0 %v512, %s517
        %v519 = vpop.permute.xlu0 %518
        %v520 = vlaneseq
        %v521 = vshrl.u32 %v520, 7
        %v522 = vsub.s32 5, %v521
        %v523 = vrot.slane %v183, %v522
        %525 = vbcast.lane.b32.xlu0 %v523, 256
        %v526 = vpop.permute.xlu0 %525
        %s528 = sor.u32 256, 8
        %529 = vbcast.lane.b32.xlu0 %v523, %s528
        %v530 = vpop.permute.xlu0 %529
        %v531 = vlaneseq
        %v532 = vshrl.u32 %v531, 7
        %v533 = vsub.s32 6, %v532
        %v534 = vrot.slane %v183, %v533
        %536 = vbcast.lane.b32.xlu0 %v534, 256
        %v537 = vpop.permute.xlu0 %536
        %s539 = sor.u32 256, 8
        %540 = vbcast.lane.b32.xlu0 %v534, %s539
        %v541 = vpop.permute.xlu0 %540
        %v542 = vlaneseq
        %v543 = vshrl.u32 %v542, 7
        %v544 = vsub.s32 7, %v543
        %v545 = vrot.slane %v183, %v544
        %547 = vbcast.lane.b32.xlu0 %v545, 256
        %v548 = vpop.permute.xlu0 %547
        %s550 = sor.u32 256, 8
        %551 = vbcast.lane.b32.xlu0 %v545, %s550
        %v552 = vpop.permute.xlu0 %551
        %v553 = vsel %vm360, %v383, %v471
        %v554 = vsel %vm360, %v387, %v475
        %v555 = vsel %vm360, %v394, %v482
        %v556 = vsel %vm360, %v398, %v486
        %v557 = vsel %vm360, %v405, %v493
        %v558 = vsel %vm360, %v409, %v497
        %v559 = vsel %vm360, %v416, %v504
        %v560 = vsel %vm360, %v420, %v508
        %v561 = vsel %vm360, %v427, %v515
        %v562 = vsel %vm360, %v431, %v519
        %v563 = vsel %vm360, %v438, %v526
        %v564 = vsel %vm360, %v442, %v530
        %v565 = vsel %vm360, %v449, %v537
        %v566 = vsel %vm360, %v453, %v541
        %v567 = vsel %vm360, %v460, %v548
        %v568 = vsel %vm360, %v464, %v552
        %v569 = vcombine.low %v361, %v365
        %v570 = vcombine.high %v361, %v365
        %v572 = vunpack.c.l.s4 1983009808
        %v573 = vunpack.c.0.s8 %v572
        %v574 = vlaneseq
        %v575 = vshrl.u32 %v574, 7
        %v576 = vsub.s32 %v573, %v575
        %v577 = vrot.slane %v569, %v576
        %v579 = vunpack.c.l.s4 1983009808
        %v580 = vunpack.c.0.s8 %v579
        %v581 = vlaneseq
        %v582 = vshrl.u32 %v581, 7
        %v583 = vsub.s32 %v580, %v582
        %v584 = vrot.slane %v570, %v583
        %v585 = vcombine.low %v363, %v367
        %v586 = vcombine.high %v363, %v367
        %v588 = vunpack.c.l.s4 1983009808
        %v589 = vunpack.c.0.s8 %v588
        %v590 = vlaneseq
        %v591 = vshrl.u32 %v590, 7
        %v592 = vsub.s32 %v589, %v591
        %v593 = vrot.slane %v585, %v592
        %v595 = vunpack.c.l.s4 1983009808
        %v596 = vunpack.c.0.s8 %v595
        %v597 = vlaneseq
        %v598 = vshrl.u32 %v597, 7
        %v599 = vsub.s32 %v596, %v598
        %v600 = vrot.slane %v586, %v599
        %v601 = vcombine.low %v369, %v373
        %v602 = vcombine.high %v369, %v373
        %v604 = vunpack.c.l.s4 1983009808
        %v605 = vunpack.c.0.s8 %v604
        %v606 = vlaneseq
        %v607 = vshrl.u32 %v606, 7
        %v608 = vsub.s32 %v605, %v607
        %v609 = vrot.slane %v601, %v608
        %v611 = vunpack.c.l.s4 1983009808
        %v612 = vunpack.c.0.s8 %v611
        %v613 = vlaneseq
        %v614 = vshrl.u32 %v613, 7
        %v615 = vsub.s32 %v612, %v614
        %v616 = vrot.slane %v602, %v615
        %v617 = vcombine.low %v371, %v375
        %v618 = vcombine.high %v371, %v375
        %v620 = vunpack.c.l.s4 1983009808
        %v621 = vunpack.c.0.s8 %v620
        %v622 = vlaneseq
        %v623 = vshrl.u32 %v622, 7
        %v624 = vsub.s32 %v621, %v623
        %v625 = vrot.slane %v617, %v624
        %v627 = vunpack.c.l.s4 1983009808
        %v628 = vunpack.c.0.s8 %v627
        %v629 = vlaneseq
        %v630 = vshrl.u32 %v629, 7
        %v631 = vsub.s32 %v628, %v630
        %v632 = vrot.slane %v618, %v631
        %v633 = vcombine.low %v577, %v593
        %v634 = vcombine.high %v577, %v593
        %v636 = vunpack.c.l.s4 1934713408
        %v637 = vunpack.c.0.s8 %v636
        %v638 = vlaneseq
        %v639 = vshrl.u32 %v638, 7
        %v640 = vsub.s32 %v637, %v639
        %v641 = vrot.slane %v633, %v640
        %v643 = vunpack.c.l.s4 1934713408
        %v644 = vunpack.c.0.s8 %v643
        %v645 = vlaneseq
        %v646 = vshrl.u32 %v645, 7
        %v647 = vsub.s32 %v644, %v646
        %v648 = vrot.slane %v634, %v647
        %v649 = vcombine.low %v584, %v600
        %v650 = vcombine.high %v584, %v600
        %v652 = vunpack.c.l.s4 1934713408
        %v653 = vunpack.c.0.s8 %v652
        %v654 = vlaneseq
        %v655 = vshrl.u32 %v654, 7
        %v656 = vsub.s32 %v653, %v655
        %v657 = vrot.slane %v649, %v656
        %v659 = vunpack.c.l.s4 1934713408
        %v660 = vunpack.c.0.s8 %v659
        %v661 = vlaneseq
        %v662 = vshrl.u32 %v661, 7
        %v663 = vsub.s32 %v660, %v662
        %v664 = vrot.slane %v650, %v663
        %v665 = vcombine.low %v609, %v625
        %v666 = vcombine.high %v609, %v625
        %v668 = vunpack.c.l.s4 1934713408
        %v669 = vunpack.c.0.s8 %v668
        %v670 = vlaneseq
        %v671 = vshrl.u32 %v670, 7
        %v672 = vsub.s32 %v669, %v671
        %v673 = vrot.slane %v665, %v672
        %v675 = vunpack.c.l.s4 1934713408
        %v676 = vunpack.c.0.s8 %v675
        %v677 = vlaneseq
        %v678 = vshrl.u32 %v677, 7
        %v679 = vsub.s32 %v676, %v678
        %v680 = vrot.slane %v666, %v679
        %v681 = vcombine.low %v616, %v632
        %v682 = vcombine.high %v616, %v632
        %v684 = vunpack.c.l.s4 1934713408
        %v685 = vunpack.c.0.s8 %v684
        %v686 = vlaneseq
        %v687 = vshrl.u32 %v686, 7
        %v688 = vsub.s32 %v685, %v687
        %v689 = vrot.slane %v681, %v688
        %v691 = vunpack.c.l.s4 1934713408
        %v692 = vunpack.c.0.s8 %v691
        %v693 = vlaneseq
        %v694 = vshrl.u32 %v693, 7
        %v695 = vsub.s32 %v692, %v694
        %v696 = vrot.slane %v682, %v695
        %v697 = vcombine.low %v641, %v673
        %v698 = vcombine.high %v641, %v673
        %v699 = vcombine.low %v648, %v680
        %v700 = vcombine.high %v648, %v680
        %v701 = vcombine.low %v657, %v689
        %v702 = vcombine.high %v657, %v689
        %v703 = vcombine.low %v664, %v696
        %v704 = vcombine.high %v664, %v696
        %v705 = vcombine.low %v362, %v366
        %v706 = vcombine.high %v362, %v366
        %v708 = vunpack.c.l.s4 1983009808
        %v709 = vunpack.c.0.s8 %v708
        %v710 = vlaneseq
        %v711 = vshrl.u32 %v710, 7
        %v712 = vsub.s32 %v709, %v711
        %v713 = vrot.slane %v705, %v712
        %v715 = vunpack.c.l.s4 1983009808
        %v716 = vunpack.c.0.s8 %v715
        %v717 = vlaneseq
        %v718 = vshrl.u32 %v717, 7
        %v719 = vsub.s32 %v716, %v718
        %v720 = vrot.slane %v706, %v719
        %v721 = vcombine.low %v364, %v368
        %v722 = vcombine.high %v364, %v368
        %v724 = vunpack.c.l.s4 1983009808
        %v725 = vunpack.c.0.s8 %v724
        %v726 = vlaneseq
        %v727 = vshrl.u32 %v726, 7
        %v728 = vsub.s32 %v725, %v727
        %v729 = vrot.slane %v721, %v728
        %v731 = vunpack.c.l.s4 1983009808
        %v732 = vunpack.c.0.s8 %v731
        %v733 = vlaneseq
        %v734 = vshrl.u32 %v733, 7
        %v735 = vsub.s32 %v732, %v734
        %v736 = vrot.slane %v722, %v735
        %v737 = vcombine.low %v370, %v374
        %v738 = vcombine.high %v370, %v374
        %v740 = vunpack.c.l.s4 1983009808
        %v741 = vunpack.c.0.s8 %v740
        %v742 = vlaneseq
        %v743 = vshrl.u32 %v742, 7
        %v744 = vsub.s32 %v741, %v743
        %v745 = vrot.slane %v737, %v744
        %v747 = vunpack.c.l.s4 1983009808
        %v748 = vunpack.c.0.s8 %v747
        %v749 = vlaneseq
        %v750 = vshrl.u32 %v749, 7
        %v751 = vsub.s32 %v748, %v750
        %v752 = vrot.slane %v738, %v751
        %v753 = vcombine.low %v372, %v376
        %v754 = vcombine.high %v372, %v376
        %v756 = vunpack.c.l.s4 1983009808
        %v757 = vunpack.c.0.s8 %v756
        %v758 = vlaneseq
        %v759 = vshrl.u32 %v758, 7
        %v760 = vsub.s32 %v757, %v759
        %v761 = vrot.slane %v753, %v760
        %v763 = vunpack.c.l.s4 1983009808
        %v764 = vunpack.c.0.s8 %v763
        %v765 = vlaneseq
        %v766 = vshrl.u32 %v765, 7
        %v767 = vsub.s32 %v764, %v766
        %v768 = vrot.slane %v754, %v767
        %v769 = vcombine.low %v713, %v729
        %v770 = vcombine.high %v713, %v729
        %v772 = vunpack.c.l.s4 1934713408
        %v773 = vunpack.c.0.s8 %v772
        %v774 = vlaneseq
        %v775 = vshrl.u32 %v774, 7
        %v776 = vsub.s32 %v773, %v775
        %v777 = vrot.slane %v769, %v776
        %v779 = vunpack.c.l.s4 1934713408
        %v780 = vunpack.c.0.s8 %v779
        %v781 = vlaneseq
        %v782 = vshrl.u32 %v781, 7
        %v783 = vsub.s32 %v780, %v782
        %v784 = vrot.slane %v770, %v783
        %v785 = vcombine.low %v720, %v736
        %v786 = vcombine.high %v720, %v736
        %v788 = vunpack.c.l.s4 1934713408
        %v789 = vunpack.c.0.s8 %v788
        %v790 = vlaneseq
        %v791 = vshrl.u32 %v790, 7
        %v792 = vsub.s32 %v789, %v791
        %v793 = vrot.slane %v785, %v792
        %v795 = vunpack.c.l.s4 1934713408
        %v796 = vunpack.c.0.s8 %v795
        %v797 = vlaneseq
        %v798 = vshrl.u32 %v797, 7
        %v799 = vsub.s32 %v796, %v798
        %v800 = vrot.slane %v786, %v799
        %v801 = vcombine.low %v745, %v761
        %v802 = vcombine.high %v745, %v761
        %v804 = vunpack.c.l.s4 1934713408
        %v805 = vunpack.c.0.s8 %v804
        %v806 = vlaneseq
        %v807 = vshrl.u32 %v806, 7
        %v808 = vsub.s32 %v805, %v807
        %v809 = vrot.slane %v801, %v808
        %v811 = vunpack.c.l.s4 1934713408
        %v812 = vunpack.c.0.s8 %v811
        %v813 = vlaneseq
        %v814 = vshrl.u32 %v813, 7
        %v815 = vsub.s32 %v812, %v814
        %v816 = vrot.slane %v802, %v815
        %v817 = vcombine.low %v752, %v768
        %v818 = vcombine.high %v752, %v768
        %v820 = vunpack.c.l.s4 1934713408
        %v821 = vunpack.c.0.s8 %v820
        %v822 = vlaneseq
        %v823 = vshrl.u32 %v822, 7
        %v824 = vsub.s32 %v821, %v823
        %v825 = vrot.slane %v817, %v824
        %v827 = vunpack.c.l.s4 1934713408
        %v828 = vunpack.c.0.s8 %v827
        %v829 = vlaneseq
        %v830 = vshrl.u32 %v829, 7
        %v831 = vsub.s32 %v828, %v830
        %v832 = vrot.slane %v818, %v831
        %v833 = vcombine.low %v777, %v809
        %v834 = vcombine.high %v777, %v809
        %v835 = vcombine.low %v784, %v816
        %v836 = vcombine.high %v784, %v816
        %v837 = vcombine.low %v793, %v825
        %v838 = vcombine.high %v793, %v825
        %v839 = vcombine.low %v800, %v832
        %v840 = vcombine.high %v800, %v832
        %842 = vrot.lane.b32.xlu0 %v698, 2
        %v843 = vpop.permute.xlu0 %842
        %846 = vrot.lane.b32.xlu0 %v699, 4
        %v847 = vpop.permute.xlu0 %846
        %850 = vrot.lane.b32.xlu0 %v700, 6
        %v851 = vpop.permute.xlu0 %850
        %854 = vrot.lane.b32.xlu0 %v701, 8
        %v855 = vpop.permute.xlu0 %854
        %858 = vrot.lane.b32.xlu0 %v702, 10
        %v859 = vpop.permute.xlu0 %858
        %862 = vrot.lane.b32.xlu0 %v703, 12
        %v863 = vpop.permute.xlu0 %862
        %866 = vrot.lane.b32.xlu0 %v704, 14
        %v867 = vpop.permute.xlu0 %866
        %870 = vrot.lane.b32.xlu0 %v833, 16
        %v871 = vpop.permute.xlu0 %870
        %874 = vrot.lane.b32.xlu0 %v834, 18
        %v875 = vpop.permute.xlu0 %874
        %878 = vrot.lane.b32.xlu0 %v835, 20
        %v879 = vpop.permute.xlu0 %878
        %882 = vrot.lane.b32.xlu0 %v836, 22
        %v883 = vpop.permute.xlu0 %882
        %886 = vrot.lane.b32.xlu0 %v837, 24
        %v887 = vpop.permute.xlu0 %886
        %890 = vrot.lane.b32.xlu0 %v838, 26
        %v891 = vpop.permute.xlu0 %890
        %894 = vrot.lane.b32.xlu0 %v839, 28
        %v895 = vpop.permute.xlu0 %894
        %898 = vrot.lane.b32.xlu0 %v840, 30
        %v899 = vpop.permute.xlu0 %898
        %vm901 = vcmask 15360
        %v902 = vsel %vm901, %v697, %v843
        %vm903 = vcmask 31744
        %v904 = vsel %vm903, %v902, %v847
        %vm905 = vcmask 48128
        %v906 = vsel %vm905, %v904, %v851
        %vm907 = vcmask 64512
        %v908 = vsel %vm907, %v906, %v855
        %vm909 = vcmask 80896
        %v910 = vsel %vm909, %v908, %v859
        %vm911 = vcmask 97280
        %v912 = vsel %vm911, %v910, %v863
        %vm913 = vcmask 113664
        %v914 = vsel %vm913, %v912, %v867
        %vm915 = vcmask 130048
        %v916 = vsel %vm915, %v914, %v871
        %vm917 = vcmask 146432
        %v918 = vsel %vm917, %v916, %v875
        %vm919 = vcmask 162816
        %v920 = vsel %vm919, %v918, %v879
        %vm921 = vcmask 179200
        %v922 = vsel %vm921, %v920, %v883
        %vm923 = vcmask 195584
        %v924 = vsel %vm923, %v922, %v887
        %vm925 = vcmask 211968
        %v926 = vsel %vm925, %v924, %v891
        %vm927 = vcmask 228352
        %v928 = vsel %vm927, %v926, %v895
        %vm929 = vcmask 244736
        %v930 = vsel %vm929, %v928, %v899
        %vm931 = vcmask 261120
        %932 = vst.msk [vmem:[%s164] sm:$0xff] %vm931, %v930
        %v933 = vcombine.low %v553, %v557
        %v934 = vcombine.high %v553, %v557
        %v936 = vunpack.c.l.s4 1983009808
        %v937 = vunpack.c.0.s8 %v936
        %v938 = vlaneseq
        %v939 = vshrl.u32 %v938, 7
        %v940 = vsub.s32 %v937, %v939
        %v941 = vrot.slane %v933, %v940
        %v943 = vunpack.c.l.s4 1983009808
        %v944 = vunpack.c.0.s8 %v943
        %v945 = vlaneseq
        %v946 = vshrl.u32 %v945, 7
        %v947 = vsub.s32 %v944, %v946
        %v948 = vrot.slane %v934, %v947
        %v949 = vcombine.low %v555, %v559
        %v950 = vcombine.high %v555, %v559
        %v952 = vunpack.c.l.s4 1983009808
        %v953 = vunpack.c.0.s8 %v952
        %v954 = vlaneseq
        %v955 = vshrl.u32 %v954, 7
        %v956 = vsub.s32 %v953, %v955
        %v957 = vrot.slane %v949, %v956
        %v959 = vunpack.c.l.s4 1983009808
        %v960 = vunpack.c.0.s8 %v959
        %v961 = vlaneseq
        %v962 = vshrl.u32 %v961, 7
        %v963 = vsub.s32 %v960, %v962
        %v964 = vrot.slane %v950, %v963
        %v965 = vcombine.low %v561, %v565
        %v966 = vcombine.high %v561, %v565
        %v968 = vunpack.c.l.s4 1983009808
        %v969 = vunpack.c.0.s8 %v968
        %v970 = vlaneseq
        %v971 = vshrl.u32 %v970, 7
        %v972 = vsub.s32 %v969, %v971
        %v973 = vrot.slane %v965, %v972
        %v975 = vunpack.c.l.s4 1983009808
        %v976 = vunpack.c.0.s8 %v975
        %v977 = vlaneseq
        %v978 = vshrl.u32 %v977, 7
        %v979 = vsub.s32 %v976, %v978
        %v980 = vrot.slane %v966, %v979
        %v981 = vcombine.low %v563, %v567
        %v982 = vcombine.high %v563, %v567
        %v984 = vunpack.c.l.s4 1983009808
        %v985 = vunpack.c.0.s8 %v984
        %v986 = vlaneseq
        %v987 = vshrl.u32 %v986, 7
        %v988 = vsub.s32 %v985, %v987
        %v989 = vrot.slane %v981, %v988
        %v991 = vunpack.c.l.s4 1983009808
        %v992 = vunpack.c.0.s8 %v991
        %v993 = vlaneseq
        %v994 = vshrl.u32 %v993, 7
        %v995 = vsub.s32 %v992, %v994
        %v996 = vrot.slane %v982, %v995
        %v997 = vcombine.low %v941, %v957
        %v998 = vcombine.high %v941, %v957
        %v1000 = vunpack.c.l.s4 1934713408
        %v1001 = vunpack.c.0.s8 %v1000
        %v1002 = vlaneseq
        %v1003 = vshrl.u32 %v1002, 7
        %v1004 = vsub.s32 %v1001, %v1003
        %v1005 = vrot.slane %v997, %v1004
        %v1007 = vunpack.c.l.s4 1934713408
        %v1008 = vunpack.c.0.s8 %v1007
        %v1009 = vlaneseq
        %v1010 = vshrl.u32 %v1009, 7
        %v1011 = vsub.s32 %v1008, %v1010
        %v1012 = vrot.slane %v998, %v1011
        %v1013 = vcombine.low %v948, %v964
        %v1014 = vcombine.high %v948, %v964
        %v1016 = vunpack.c.l.s4 1934713408
        %v1017 = vunpack.c.0.s8 %v1016
        %v1018 = vlaneseq
        %v1019 = vshrl.u32 %v1018, 7
        %v1020 = vsub.s32 %v1017, %v1019
        %v1021 = vrot.slane %v1013, %v1020
        %v1023 = vunpack.c.l.s4 1934713408
        %v1024 = vunpack.c.0.s8 %v1023
        %v1025 = vlaneseq
        %v1026 = vshrl.u32 %v1025, 7
        %v1027 = vsub.s32 %v1024, %v1026
        %v1028 = vrot.slane %v1014, %v1027
        %v1029 = vcombine.low %v973, %v989
        %v1030 = vcombine.high %v973, %v989
        %v1032 = vunpack.c.l.s4 1934713408
        %v1033 = vunpack.c.0.s8 %v1032
        %v1034 = vlaneseq
        %v1035 = vshrl.u32 %v1034, 7
        %v1036 = vsub.s32 %v1033, %v1035
        %v1037 = vrot.slane %v1029, %v1036
        %v1039 = vunpack.c.l.s4 1934713408
        %v1040 = vunpack.c.0.s8 %v1039
        %v1041 = vlaneseq
        %v1042 = vshrl.u32 %v1041, 7
        %v1043 = vsub.s32 %v1040, %v1042
        %v1044 = vrot.slane %v1030, %v1043
        %v1045 = vcombine.low %v980, %v996
        %v1046 = vcombine.high %v980, %v996
        %v1048 = vunpack.c.l.s4 1934713408
        %v1049 = vunpack.c.0.s8 %v1048
        %v1050 = vlaneseq
        %v1051 = vshrl.u32 %v1050, 7
        %v1052 = vsub.s32 %v1049, %v1051
        %v1053 = vrot.slane %v1045, %v1052
        %v1055 = vunpack.c.l.s4 1934713408
        %v1056 = vunpack.c.0.s8 %v1055
        %v1057 = vlaneseq
        %v1058 = vshrl.u32 %v1057, 7
        %v1059 = vsub.s32 %v1056, %v1058
        %v1060 = vrot.slane %v1046, %v1059
        %v1061 = vcombine.low %v1005, %v1037
        %v1062 = vcombine.high %v1005, %v1037
        %v1063 = vcombine.low %v1012, %v1044
        %v1064 = vcombine.high %v1012, %v1044
        %v1065 = vcombine.low %v1021, %v1053
        %v1066 = vcombine.high %v1021, %v1053
        %v1067 = vcombine.low %v1028, %v1060
        %v1068 = vcombine.high %v1028, %v1060
        %v1069 = vcombine.low %v554, %v558
        %v1070 = vcombine.high %v554, %v558
        %v1072 = vunpack.c.l.s4 1983009808
        %v1073 = vunpack.c.0.s8 %v1072
        %v1074 = vlaneseq
        %v1075 = vshrl.u32 %v1074, 7
        %v1076 = vsub.s32 %v1073, %v1075
        %v1077 = vrot.slane %v1069, %v1076
        %v1079 = vunpack.c.l.s4 1983009808
        %v1080 = vunpack.c.0.s8 %v1079
        %v1081 = vlaneseq
        %v1082 = vshrl.u32 %v1081, 7
        %v1083 = vsub.s32 %v1080, %v1082
        %v1084 = vrot.slane %v1070, %v1083
        %v1085 = vcombine.low %v556, %v560
        %v1086 = vcombine.high %v556, %v560
        %v1088 = vunpack.c.l.s4 1983009808
        %v1089 = vunpack.c.0.s8 %v1088
        %v1090 = vlaneseq
        %v1091 = vshrl.u32 %v1090, 7
        %v1092 = vsub.s32 %v1089, %v1091
        %v1093 = vrot.slane %v1085, %v1092
        %v1095 = vunpack.c.l.s4 1983009808
        %v1096 = vunpack.c.0.s8 %v1095
        %v1097 = vlaneseq
        %v1098 = vshrl.u32 %v1097, 7
        %v1099 = vsub.s32 %v1096, %v1098
        %v1100 = vrot.slane %v1086, %v1099
        %v1101 = vcombine.low %v562, %v566
        %v1102 = vcombine.high %v562, %v566
        %v1104 = vunpack.c.l.s4 1983009808
        %v1105 = vunpack.c.0.s8 %v1104
        %v1106 = vlaneseq
        %v1107 = vshrl.u32 %v1106, 7
        %v1108 = vsub.s32 %v1105, %v1107
        %v1109 = vrot.slane %v1101, %v1108
        %v1111 = vunpack.c.l.s4 1983009808
        %v1112 = vunpack.c.0.s8 %v1111
        %v1113 = vlaneseq
        %v1114 = vshrl.u32 %v1113, 7
        %v1115 = vsub.s32 %v1112, %v1114
        %v1116 = vrot.slane %v1102, %v1115
        %v1117 = vcombine.low %v564, %v568
        %v1118 = vcombine.high %v564, %v568
        %v1120 = vunpack.c.l.s4 1983009808
        %v1121 = vunpack.c.0.s8 %v1120
        %v1122 = vlaneseq
        %v1123 = vshrl.u32 %v1122, 7
        %v1124 = vsub.s32 %v1121, %v1123
        %v1125 = vrot.slane %v1117, %v1124
        %v1127 = vunpack.c.l.s4 1983009808
        %v1128 = vunpack.c.0.s8 %v1127
        %v1129 = vlaneseq
        %v1130 = vshrl.u32 %v1129, 7
        %v1131 = vsub.s32 %v1128, %v1130
        %v1132 = vrot.slane %v1118, %v1131
        %v1133 = vcombine.low %v1077, %v1093
        %v1134 = vcombine.high %v1077, %v1093
        %v1136 = vunpack.c.l.s4 1934713408
        %v1137 = vunpack.c.0.s8 %v1136
        %v1138 = vlaneseq
        %v1139 = vshrl.u32 %v1138, 7
        %v1140 = vsub.s32 %v1137, %v1139
        %v1141 = vrot.slane %v1133, %v1140
        %v1143 = vunpack.c.l.s4 1934713408
        %v1144 = vunpack.c.0.s8 %v1143
        %v1145 = vlaneseq
        %v1146 = vshrl.u32 %v1145, 7
        %v1147 = vsub.s32 %v1144, %v1146
        %v1148 = vrot.slane %v1134, %v1147
        %v1149 = vcombine.low %v1084, %v1100
        %v1150 = vcombine.high %v1084, %v1100
        %v1152 = vunpack.c.l.s4 1934713408
        %v1153 = vunpack.c.0.s8 %v1152
        %v1154 = vlaneseq
        %v1155 = vshrl.u32 %v1154, 7
        %v1156 = vsub.s32 %v1153, %v1155
        %v1157 = vrot.slane %v1149, %v1156
        %v1159 = vunpack.c.l.s4 1934713408
        %v1160 = vunpack.c.0.s8 %v1159
        %v1161 = vlaneseq
        %v1162 = vshrl.u32 %v1161, 7
        %v1163 = vsub.s32 %v1160, %v1162
        %v1164 = vrot.slane %v1150, %v1163
        %v1165 = vcombine.low %v1109, %v1125
        %v1166 = vcombine.high %v1109, %v1125
        %v1168 = vunpack.c.l.s4 1934713408
        %v1169 = vunpack.c.0.s8 %v1168
        %v1170 = vlaneseq
        %v1171 = vshrl.u32 %v1170, 7
        %v1172 = vsub.s32 %v1169, %v1171
        %v1173 = vrot.slane %v1165, %v1172
        %v1175 = vunpack.c.l.s4 1934713408
        %v1176 = vunpack.c.0.s8 %v1175
        %v1177 = vlaneseq
        %v1178 = vshrl.u32 %v1177, 7
        %v1179 = vsub.s32 %v1176, %v1178
        %v1180 = vrot.slane %v1166, %v1179
        %v1181 = vcombine.low %v1116, %v1132
        %v1182 = vcombine.high %v1116, %v1132
        %v1184 = vunpack.c.l.s4 1934713408
        %v1185 = vunpack.c.0.s8 %v1184
        %v1186 = vlaneseq
        %v1187 = vshrl.u32 %v1186, 7
        %v1188 = vsub.s32 %v1185, %v1187
        %v1189 = vrot.slane %v1181, %v1188
        %v1191 = vunpack.c.l.s4 1934713408
        %v1192 = vunpack.c.0.s8 %v1191
        %v1193 = vlaneseq
        %v1194 = vshrl.u32 %v1193, 7
        %v1195 = vsub.s32 %v1192, %v1194
        %v1196 = vrot.slane %v1182, %v1195
        %v1197 = vcombine.low %v1141, %v1173
        %v1198 = vcombine.high %v1141, %v1173
        %v1199 = vcombine.low %v1148, %v1180
        %v1200 = vcombine.high %v1148, %v1180
        %v1201 = vcombine.low %v1157, %v1189
        %v1202 = vcombine.high %v1157, %v1189
        %v1203 = vcombine.low %v1164, %v1196
        %v1204 = vcombine.high %v1164, %v1196
        %1206 = vrot.lane.b32.xlu0 %v1062, 2
        %v1207 = vpop.permute.xlu0 %1206
        %1210 = vrot.lane.b32.xlu0 %v1063, 4
        %v1211 = vpop.permute.xlu0 %1210
        %1214 = vrot.lane.b32.xlu0 %v1064, 6
        %v1215 = vpop.permute.xlu0 %1214
        %1218 = vrot.lane.b32.xlu0 %v1065, 8
        %v1219 = vpop.permute.xlu0 %1218
        %1222 = vrot.lane.b32.xlu0 %v1066, 10
        %v1223 = vpop.permute.xlu0 %1222
        %1226 = vrot.lane.b32.xlu0 %v1067, 12
        %v1227 = vpop.permute.xlu0 %1226
        %1230 = vrot.lane.b32.xlu0 %v1068, 14
        %v1231 = vpop.permute.xlu0 %1230
        %1234 = vrot.lane.b32.xlu0 %v1197, 16
        %v1235 = vpop.permute.xlu0 %1234
        %1238 = vrot.lane.b32.xlu0 %v1198, 18
        %v1239 = vpop.permute.xlu0 %1238
        %1242 = vrot.lane.b32.xlu0 %v1199, 20
        %v1243 = vpop.permute.xlu0 %1242
        %1246 = vrot.lane.b32.xlu0 %v1200, 22
        %v1247 = vpop.permute.xlu0 %1246
        %1250 = vrot.lane.b32.xlu0 %v1201, 24
        %v1251 = vpop.permute.xlu0 %1250
        %1254 = vrot.lane.b32.xlu0 %v1202, 26
        %v1255 = vpop.permute.xlu0 %1254
        %1258 = vrot.lane.b32.xlu0 %v1203, 28
        %v1259 = vpop.permute.xlu0 %1258
        %1262 = vrot.lane.b32.xlu0 %v1204, 30
        %v1263 = vpop.permute.xlu0 %1262
        %v1265 = vsel %vm901, %v1061, %v1207
        %v1266 = vsel %vm903, %v1265, %v1211
        %v1267 = vsel %vm905, %v1266, %v1215
        %v1268 = vsel %vm907, %v1267, %v1219
        %v1269 = vsel %vm909, %v1268, %v1223
        %v1270 = vsel %vm911, %v1269, %v1227
        %v1271 = vsel %vm913, %v1270, %v1231
        %v1272 = vsel %vm915, %v1271, %v1235
        %v1273 = vsel %vm917, %v1272, %v1239
        %v1274 = vsel %vm919, %v1273, %v1243
        %v1275 = vsel %vm921, %v1274, %v1247
        %v1276 = vsel %vm923, %v1275, %v1251
        %v1277 = vsel %vm925, %v1276, %v1255
        %v1278 = vsel %vm927, %v1277, %v1259
        %v1279 = vsel %vm929, %v1278, %v1263
        %1281 = vrot.lane.b32.xlu0 %v1279, 32
        %v1282 = vpop.permute.xlu0 %1281
        %vm1284 = vcmask 523520
        %1285 = vst.msk [vmem:[%s164] sm:$0xff] %vm1284, %v1282
        %s1286 = sand.u32 %s79, 1
        %s1287 = scalar_lea.sflag [#allocation4], %s1286
        %s1288 = sand.u32 %s79, 1
        %s1289 = smul.addr %s1288, 8
        %s1290 = scalar_lea.vmem [#allocation5], %s1289
        // Predicated region
        $region29: #{tpu_custom_call.1} parent=23 // pred_check
          %p1291 = pneg %p89
        $region30: #{tpu_custom_call.1} parent=23 // pred_check_branch
          %1293 = sbr.rel (%p1291) target = $region32
        $region31: #{tpu_custom_call.1} parent=23 // pred_region
          %s1295 = ssub.s32 128, 128
          %1296 = vsyncadd %s1287, %s1295
          %s1297 = smul.addr %s24, 2
          %s1298 = sadd.s32 %s25, %s1297
          %s1299 = smul.addr %s23, 2
          %s1300 = sadd.s32 %s1298, %s1299
          %s1301 = smul.addr %s1300, 128
          %s1302 = scalar_lea.hbm %s1, %s1301
          %s1304 = sshll.u32 %s1290, 4
          %s1305 = int_to_ptr.vmem [resolvable:$true] %s1304
          %1307 = dma.vmem_to_hbm [thread:$0]  %s1305, 128, %s1302, %s1287
        $region32: #{tpu_custom_call.1} parent=23 // pred_fallthru
          _
      $region24: #{tpu_custom_call.1} parent=5 // pred_fallthru
        _
      %p1308 = scmp.le.s32.totalorder 2, %s13
      // Predicated region
      $region33: #{tpu_custom_call.1} parent=5 // pred_check
        %p1309 = pneg %p1308
      $region34: #{tpu_custom_call.1} parent=5 // pred_check_branch
        %1311 = sbr.rel (%p1309) target = $region36
      $region35: #{tpu_custom_call.1} parent=5 // pred_region
        %s1312 = ssub.s32 %s13, 2
        // Predicated region
        $region37: #{tpu_custom_call.1} parent=35 // pred_check
          %p1313 = pneg %p95
        $region38: #{tpu_custom_call.1} parent=35 // pred_check_branch
          %1315 = sbr.rel (%p1313) target = $region40
        $region39: #{tpu_custom_call.1} parent=35 // pred_region
          %s1316 = sand.u32 %s80, 1
          %s1317 = scalar_lea.sflag [#allocation4], %s1316
          %s1318 = sand.u32 %s80, 1
          %s1319 = smul.addr %s1318, 8
          %s1320 = scalar_lea.vmem [#allocation5], %s1319
          %1321 = dma.done %s1317, 128
        $region40: #{tpu_custom_call.1} parent=35 // pred_fallthru
          _
      $region36: #{tpu_custom_call.1} parent=5 // pred_fallthru
        _
    $region6: #{tpu_custom_call.1} parent=1 // loop_footer
      %s17 = sadd.s32 1, %s13
    $region7: #{tpu_custom_call.1} parent=1 // loop_footer_branch
      %12 = sbr.rel target = $region3
    $region8: #{tpu_custom_call.1} parent=1 // loop_exit
      _
    %1322 = vsyncpa [#allocation3], 1
    %s1323 = scalar_lea.sflag [#allocation3], 1
    %1324 = vsyncpa %s1323, 1
    %1325 = vsyncpa [#allocation4], 1
    %s1326 = scalar_lea.sflag [#allocation4], 1
    %1327 = vsyncpa %s1326, 1

</llo_original>
